<compile_context>
chip_gen: v5e
topology: v5e:2x2
jax: 0.10.0
libtpu: 0.0.40
codegen_flags: <defaults>
</compile_context>

<pallas_src>
import functools

import jax
import jax.numpy as jnp
from jax.experimental import pallas as pl
from jax.experimental.pallas import tpu as pltpu


def _round_up(x, m):
    return ((x + m - 1) // m) * m


# --------------------------- fused GEMM kernel ------------------------------
def _fused_gemm_epilogue_kernel(a_ref, w_ref, bias_ref, *rest,
                                apply_relu, has_residual, multi_k):
    rest = list(rest)
    res_ref = rest.pop(0) if has_residual else None
    o_ref = rest.pop(0)
    acc_ref = rest.pop(0) if multi_k else None

    def epilogue(acc_f32):
        y = acc_f32 + bias_ref[...]                 # folded-BN bias
        if res_ref is not None:
            y = y + res_ref[...].astype(jnp.float32)
        if apply_relu:
            y = jnp.maximum(y, 0.0)
        o_ref[...] = y.astype(o_ref.dtype)

    if multi_k:
        k = pl.program_id(2)

        @pl.when(k == 0)
        def _():
            acc_ref[...] = jnp.zeros_like(acc_ref)

        acc_ref[...] += jnp.dot(a_ref[...], w_ref[...],
                                preferred_element_type=jnp.float32)

        @pl.when(k == pl.num_programs(2) - 1)
        def _():
            epilogue(acc_ref[...])
    else:
        # Single reduction step: no accumulator scratch / VMEM round trip.
        epilogue(jnp.dot(a_ref[...], w_ref[...],
                         preferred_element_type=jnp.float32))


def fused_gemm_bias_res_relu(patches, w_km, bias, residual=None, *,
                             apply_relu=True, out_dtype=jnp.bfloat16):
    """maybe_relu(patches @ w_km + bias [+ residual]) with f32 accumulation.

    patches:  (M, K)  bf16   (im2col rows)
    w_km:     (K, Np) bf16   (BN scale already folded in), Np % 128 == 0
    bias:     (Np,)   f32
    residual: (M, Np) bf16 or None
    """
    M, K = patches.shape
    K2, Np = w_km.shape
    assert K == K2 and Np % 128 == 0

    # ---- tile selection -----------------------------------------------
    Mp = _round_up(M, 128)
    if Mp >= 512:
        tm = 256
        Mp = _round_up(M, tm)
    elif Mp >= 256:
        tm = 128            # >= 2 parallel M blocks (v7x dual TensorCore)
    else:
        tm = Mp             # == 128

    if Np % 512 == 0:
        tn = 512
    elif Np % 256 == 0:
        tn = 256
    else:
        tn = 128

    if K <= 512:
        # Full-K block (legal: block dim == full array dim); MXU pads
        # internally, so we pay no extra HBM traffic for small K.
        Kp, tk, multi_k = K, K, False
    else:
        Kp = _round_up(K, 128)
        if Kp % 512 == 0:
            tk = 512
        elif Kp % 256 == 0:
            tk = 256
        else:
            tk = 128
        multi_k = True

    # ---- operand padding (only where actually needed) -------------------
    a = patches
    if (Mp, Kp) != (M, K):
        a = jnp.pad(a, ((0, Mp - M), (0, Kp - K)))
    w = w_km if Kp == K else jnp.pad(w_km, ((0, Kp - K), (0, 0)))
    b2d = bias.astype(jnp.float32).reshape(1, Np)

    args = [a, w, b2d]

    if multi_k:
        grid = (Mp // tm, Np // tn, Kp // tk)
        a_spec = pl.BlockSpec((tm, tk), lambda i, j, k: (i, k))
        w_spec = pl.BlockSpec((tk, tn), lambda i, j, k: (k, j))
        b_spec = pl.BlockSpec((1, tn), lambda i, j, k: (0, j))
        mo_spec = pl.BlockSpec((tm, tn), lambda i, j, k: (i, j))
        scratch = [pltpu.VMEM((tm, tn), jnp.float32)]
        semantics = ("parallel", "parallel", "arbitrary")
    else:
        grid = (Mp // tm, Np // tn)
        a_spec = pl.BlockSpec((tm, Kp), lambda i, j: (i, 0))
        w_spec = pl.BlockSpec((Kp, tn), lambda i, j: (0, j))
        b_spec = pl.BlockSpec((1, tn), lambda i, j: (0, j))
        mo_spec = pl.BlockSpec((tm, tn), lambda i, j: (i, j))
        scratch = []
        semantics = ("parallel", "parallel")

    in_specs = [a_spec, w_spec, b_spec]
    has_residual = residual is not None
    if has_residual:
        r = residual
        if Mp != M:
            r = jnp.pad(r, ((0, Mp - M), (0, 0)))
        args.append(r)
        in_specs.append(mo_spec)

    flops = 2 * Mp * Kp * Np
    bytes_accessed = sum(int(v.size) * v.dtype.itemsize for v in args)
    bytes_accessed += Mp * Np * jnp.dtype(out_dtype).itemsize

    out = pl.pallas_call(
        functools.partial(_fused_gemm_epilogue_kernel,
                          apply_relu=apply_relu,
                          has_residual=has_residual,
                          multi_k=multi_k),
        out_shape=jax.ShapeDtypeStruct((Mp, Np), out_dtype),
        grid_spec=pltpu.PrefetchScalarGridSpec(
            num_scalar_prefetch=0,
            grid=grid,
            in_specs=in_specs,
            out_specs=mo_spec,
            scratch_shapes=tuple(scratch)),
        compiler_params=pltpu.CompilerParams(
            dimension_semantics=semantics,
            vmem_limit_bytes=32 * 1024 * 1024),
        cost_estimate=pl.CostEstimate(flops=flops, transcendentals=0,
                                      bytes_accessed=bytes_accessed),
    )(*args)

    if Mp != M:
        out = out[:M]
    return out


# --------------------------- conv + BN wrapper -------------------------------
def im2col(x_nhwc, kh, kw, stride, pad):
    N, H, W, C = x_nhwc.shape
    xp = jnp.pad(x_nhwc, ((0, 0), (pad, pad), (pad, pad), (0, 0)))
    Ho = (H + 2 * pad - kh) // stride + 1
    Wo = (W + 2 * pad - kw) // stride + 1
    cols = [xp[:, i:i + stride * Ho:stride, j:j + stride * Wo:stride, :]
            for i in range(kh) for j in range(kw)]
    patches = jnp.concatenate(cols, axis=-1)         # (N, Ho, Wo, kh*kw*C)
    return patches.reshape(N * Ho * Wo, kh * kw * C), (N, Ho, Wo)


def conv_bn(x_nhwc, w_oihw, gamma, beta, mean, var, stride, *,
            residual_nhwc=None, apply_relu=True, out_dtype=jnp.bfloat16,
            eps=1e-5):
    """Conv(k x k, stride, pad=(k-1)//2, no bias) + inference BN [+res] [+ReLU].

    The activation may carry zero-padded channels beyond the conv's true Cin;
    the weight is zero-padded to match, so the extra channels contribute 0.
    Output channels are padded to a multiple of 128 (lane-dense stores)."""
    Cout, Cin_w, kh, kw = w_oihw.shape
    N, H, W, Cin = x_nhwc.shape
    assert Cin >= Cin_w
    pad = (kh - 1) // 2
    Np = _round_up(Cout, 128)

    # Fold BN into (scale, bias); fold the scale into the weight (bf16 MXU).
    scale = gamma / jnp.sqrt(var + eps)                      # (Cout,)
    bias = beta - mean * scale                               # (Cout,)
    w_taps = jnp.transpose(w_oihw, (2, 3, 1, 0))             # (kh, kw, Cin_w, Cout)
    w_taps = w_taps * scale[None, None, None, :]
    w_taps = jnp.pad(w_taps, ((0, 0), (0, 0),
                              (0, Cin - Cin_w), (0, Np - Cout)))
    w_km = w_taps.reshape(kh * kw * Cin, Np).astype(jnp.bfloat16)
    bias_p = jnp.pad(bias, (0, Np - Cout)).astype(jnp.float32)

    x_bf = x_nhwc.astype(jnp.bfloat16)
    if kh == 1 and kw == 1 and pad == 0:
        # 1x1 conv: no patch assembly, just a (strided) channel GEMM.
        xs = x_bf[:, ::stride, ::stride, :]
        Nb, Ho, Wo, _ = xs.shape
        patches = xs.reshape(Nb * Ho * Wo, Cin)
    else:
        patches, (Nb, Ho, Wo) = im2col(x_bf, kh, kw, stride, pad)

    res = None
    if residual_nhwc is not None:
        C_res = residual_nhwc.shape[-1]
        res = residual_nhwc.astype(jnp.bfloat16).reshape(Nb * Ho * Wo, C_res)
        if C_res != Np:
            res = jnp.pad(res, ((0, 0), (0, Np - C_res)))

    y = fused_gemm_bias_res_relu(patches, w_km, bias_p, res,
                                 apply_relu=apply_relu, out_dtype=out_dtype)
    return y.reshape(Nb, Ho, Wo, Np)


def basic_block_forward(x_nchw, p, stride):
    planes = p["w1"].shape[0]
    Np = _round_up(planes, 128)
    x = jnp.transpose(x_nchw, (0, 2, 3, 1))                  # NCHW -> NHWC

    # Shortcut branch first so its bf16, channel-padded output can be fused
    # into conv2's epilogue as the residual add.
    if "w_sc" in p:
        sc = conv_bn(x, p["w_sc"], p["g_sc"], p["b_sc"], p["m_sc"], p["v_sc"],
                     stride, apply_relu=False)               # (N,Ho,Wo,Np) bf16
    else:
        sc = x.astype(jnp.bfloat16)
        if sc.shape[-1] != Np:
            sc = jnp.pad(sc, ((0, 0), (0, 0), (0, 0), (0, Np - sc.shape[-1])))

    out1 = conv_bn(x, p["w1"], p["g1"], p["b1"], p["m1"], p["v1"],
                   stride, apply_relu=True)                  # bf16, Np channels
    out = conv_bn(out1, p["w2"], p["g2"], p["b2"], p["m2"], p["v2"], 1,
                  residual_nhwc=sc, apply_relu=True, out_dtype=jnp.float32)
    out = out[..., :planes]                                  # drop channel pad once
    return jnp.transpose(out, (0, 3, 1, 2))                  # NHWC -> NCHW


# ---------------- pure-JAX f32 reference (for correctness check) -------------
def _ref_conv_bn(x, w, gamma, beta, mean, var, stride, pad, eps=1e-5):
    y = jax.lax.conv_general_dilated(
        x, w, (stride, stride), [(pad, pad), (pad, pad)],
        dimension_numbers=("NCHW", "OIHW", "NCHW"))
    scale = (gamma / jnp.sqrt(var + eps)).reshape(1, -1, 1, 1)
    bias = (beta - mean * gamma / jnp.sqrt(var + eps)).reshape(1, -1, 1, 1)
    return y * scale + bias


def _ref_basic_block(x, p, stride):
    out = jax.nn.relu(_ref_conv_bn(x, p["w1"], p["g1"], p["b1"],
                                   p["m1"], p["v1"], stride, 1))
    out = _ref_conv_bn(out, p["w2"], p["g2"], p["b2"], p["m2"], p["v2"], 1, 1)
    if "w_sc" in p:
        sc = _ref_conv_bn(x, p["w_sc"], p["g_sc"], p["b_sc"],
                          p["m_sc"], p["v_sc"], stride, 0)
    else:
        sc = x
    return jax.nn.relu(out + sc)


if __name__ == "__main__":
    in_planes, planes, stride = 4, 8, 2   # stride != 1 -> shortcut conv active
    N, H, W = 2, 16, 16

    key = jax.random.PRNGKey(0)
    ks = jax.random.split(key, 18)
    x = jax.random.normal(ks[0], (N, in_planes, H, W), jnp.float32)

    def bn_params(k):
        k1, k2, k3, k4 = jax.random.split(k, 4)
        return (1.0 + 0.1 * jax.random.normal(k1, (planes,), jnp.float32),   # gamma
                0.1 * jax.random.normal(k2, (planes,), jnp.float32),         # beta
                0.1 * jax.random.normal(k3, (planes,), jnp.float32),         # running_mean
                jnp.abs(1.0 + 0.1 * jax.random.normal(k4, (planes,), jnp.float32)))  # running_var

    g1, b1, m1, v1 = bn_params(ks[2])
    g2, b2, m2, v2 = bn_params(ks[4])
    gs, bs, ms, vs = bn_params(ks[6])
    params = {
        "w1": 0.1 * jax.random.normal(ks[1], (planes, in_planes, 3, 3), jnp.float32),
        "g1": g1, "b1": b1, "m1": m1, "v1": v1,
        "w2": 0.1 * jax.random.normal(ks[3], (planes, planes, 3, 3), jnp.float32),
        "g2": g2, "b2": b2, "m2": m2, "v2": v2,
        "w_sc": 0.1 * jax.random.normal(ks[5], (planes, in_planes, 1, 1), jnp.float32),
        "g_sc": gs, "b_sc": bs, "m_sc": ms, "v_sc": vs,
    }

    out = basic_block_forward(x, params, stride)
    out = jax.block_until_ready(out)

    assert out.shape == (N, planes, H // stride, W // stride)
    ref = _ref_basic_block(x, params, stride)
    # bf16 MXU inputs + bf16 intermediates -> looser tolerance than f32.
    assert jnp.allclose(out, ref, atol=5e-2, rtol=5e-2), "mismatch vs reference"
    print("KERNEL_OK")
</pallas_src>

<mosaic_0001>
module attributes {stable_mosaic.version = 11 : i64} {
  func.func @_fused_gemm_epilogue_kernel(%arg0: i32, %arg1: i32, %arg2: memref<128x4xbf16, #tpu.memory_space<vmem>>, %arg3: memref<4x128xbf16, #tpu.memory_space<vmem>>, %arg4: memref<1x128xf32, #tpu.memory_space<vmem>>, %arg5: memref<128x128xbf16, #tpu.memory_space<vmem>>) attributes {dimension_semantics = [#tpu.dimension_semantics<parallel>, #tpu.dimension_semantics<parallel>], iteration_bounds = array<i64: 1, 1>, scalar_prefetch = 0 : i64, scratch_operands = 0 : i64, tpu.core_type = #tpu.core_type<tc>, window_params = [{transform_indices = @transform_0, window_bounds = array<i64: 128, 4>}, {transform_indices = @transform_1, window_bounds = array<i64: 4, 128>}, {transform_indices = @transform_2, window_bounds = array<i64: 1, 128>}, {transform_indices = @transform_3, window_bounds = array<i64: 128, 128>}]} {
    %c0 = arith.constant 0 : index
    %c0_0 = arith.constant 0 : index
    %0 = vector.load %arg2[%c0, %c0_0] : memref<128x4xbf16, #tpu.memory_space<vmem>>, vector<128x4xbf16>
    %c0_1 = arith.constant 0 : index
    %c0_2 = arith.constant 0 : index
    %1 = vector.load %arg3[%c0_1, %c0_2] : memref<4x128xbf16, #tpu.memory_space<vmem>>, vector<4x128xbf16>
    %cst = arith.constant dense<0.000000e+00> : vector<128x128xf32>
    %2 = tpu.matmul %0, %1, %cst {dimension_numbers = #tpu.dot_dimension_numbers<[1], [0], [0], [1], [0, 0, 1, 1], [], []>} : vector<128x4xbf16>, vector<4x128xbf16>, vector<128x128xf32> -> vector<128x128xf32>
    %c0_3 = arith.constant 0 : index
    %c0_4 = arith.constant 0 : index
    %3 = vector.load %arg4[%c0_3, %c0_4] : memref<1x128xf32, #tpu.memory_space<vmem>>, vector<1x128xf32>
    %4 = vector.broadcast %3 : vector<1x128xf32> to vector<128x128xf32>
    %5 = arith.addf %2, %4 : vector<128x128xf32>
    %6 = arith.truncf %5 : vector<128x128xf32> to vector<128x128xbf16>
    %c0_5 = arith.constant 0 : index
    %c0_6 = arith.constant 0 : index
    %7 = vector.load %arg5[%c0_5, %c0_6] : memref<128x128xbf16, #tpu.memory_space<vmem>>, vector<128x128xbf16>
    tpu.vector_store %arg5[%c0_5, %c0_6], %6 {strides = array<i32>} : memref<128x128xbf16, #tpu.memory_space<vmem>>, vector<128x128xbf16>,
    return
  }
  func.func @transform_0(%arg0: i32, %arg1: i32) -> (i32, i32) {
    %c0_i32 = arith.constant 0 : i32
    %c0_i32_0 = arith.constant 0 : i32
    return %arg0, %c0_i32 : i32, i32
  }
  func.func @transform_1(%arg0: i32, %arg1: i32) -> (i32, i32) {
    %c0_i32 = arith.constant 0 : i32
    %c0_i32_0 = arith.constant 0 : i32
    return %c0_i32, %arg1 : i32, i32
  }
  func.func @transform_2(%arg0: i32, %arg1: i32) -> (i32, i32) {
    %c0_i32 = arith.constant 0 : i32
    %c0_i32_0 = arith.constant 0 : i32
    return %c0_i32, %arg1 : i32, i32
  }
  func.func @transform_3(%arg0: i32, %arg1: i32) -> (i32, i32) {
    %c0_i32 = arith.constant 0 : i32
    return %arg0, %arg1 : i32, i32
  }
}

</mosaic_0001>

<llo_original>
// kernel: tpu_custom_call.1
$region0: #{tpu_custom_call.1}
  #allocation0 [shape = 'u32[]', space=smem, size = 0x4, offset = 0x4, fixed_abs, tag = 'smem constant byte address 0x4 - core index']
  #allocation1 [shape = 'u32[72,128]{1,0:T(1,128)}', space=vmem, size = 0x9000, scoped, tag = 'internal scratch']
  %s0 = inlined_call_operand.vmem [shape: bf16[128,4], index: 0, kind: input, shape index: {}]
  %s1 = inlined_call_operand.vmem [shape: bf16[4,128], index: 1, kind: input, shape index: {}]
  %s2 = inlined_call_operand.vmem [shape: f32[1,128], index: 2, kind: input, shape index: {}]
  %s3 = inlined_call_operand.hbm [shape: bf16[128,128], index: 3, kind: output, shape index: {}]
  %s4 = sld [smem:[#allocation0]]
  $region22: #{tpu_custom_call.1} parent=0
    _
  %s6 = ssub.s32 1, %s4
  %s7 = scalar_select 0, %s6, %s4
  $region1: #{tpu_custom_call.1} parent=0
    #allocation2 [shape = 'u8[32768]{0}', space=vmem, size = 0x8000, scoped, tag = 'output window, operand 0, single buffered']
    #allocation3 [shape = 's32[1]{0}', space=sflag, size = 0x4, scoped, tag = 'scoped memory for tpu_custom_call.1']
    %8 = vsyncpa [#allocation3], 0
    // Predicated region
    $region2: #{tpu_custom_call.1} parent=1 // pred_check
      _
    $region3: #{tpu_custom_call.1} parent=1 // pred_check_branch
      %10 = sbr.rel (0) target = $region5
    $region4: #{tpu_custom_call.1} parent=1 // pred_region
      _
    $region5: #{tpu_custom_call.1} parent=1 // pred_fallthru
      _
    // Predicated region
    $region6: #{tpu_custom_call.1} parent=1 // pred_check
      _
    $region7: #{tpu_custom_call.1} parent=1 // pred_check_branch
      %12 = sbr.rel (0) target = $region9
    $region8: #{tpu_custom_call.1} parent=1 // pred_region
      _
    $region9: #{tpu_custom_call.1} parent=1 // pred_fallthru
      _
    // Predicated region
    $region10: #{tpu_custom_call.1} parent=1 // pred_check
      _
    $region11: #{tpu_custom_call.1} parent=1 // pred_check_branch
      %14 = sbr.rel (0) target = $region13
    $region12: #{tpu_custom_call.1} parent=1 // pred_region
      _
    $region13: #{tpu_custom_call.1} parent=1 // pred_fallthru
      _
    %v16 = vld [vmem:[%s0] sm:$0xf]
    %v17 = vld [vmem:[%s0 + $0x4] sm:$0xf]
    %v18 = vld [vmem:[%s0 + $0x8] sm:$0xf]
    %v19 = vld [vmem:[%s0 + $0xc] sm:$0xf]
    %v20 = vld [vmem:[%s0 + $0x10] sm:$0xf]
    %v21 = vld [vmem:[%s0 + $0x14] sm:$0xf]
    %v22 = vld [vmem:[%s0 + $0x18] sm:$0xf]
    %v23 = vld [vmem:[%s0 + $0x1c] sm:$0xf]
    %v24 = vld [vmem:[%s0 + $0x20] sm:$0xf]
    %v25 = vld [vmem:[%s0 + $0x24] sm:$0xf]
    %v26 = vld [vmem:[%s0 + $0x28] sm:$0xf]
    %v27 = vld [vmem:[%s0 + $0x2c] sm:$0xf]
    %v28 = vld [vmem:[%s0 + $0x30] sm:$0xf]
    %v29 = vld [vmem:[%s0 + $0x34] sm:$0xf]
    %v30 = vld [vmem:[%s0 + $0x38] sm:$0xf]
    %v31 = vld [vmem:[%s0 + $0x3c] sm:$0xf]
    %v32 = vld [vmem:[%s1] sm:$0x3]
    %v33 = vld [vmem:[%s2] sm:$0x1]
    %v35 = vperm.slane %v33, 0
    %v53 = vunpack.c.l.b16 %v16
    %v54 = vunpack.c.l.b16 %v17
    %v55 = vunpack.c.l.b16 %v18
    %v56 = vunpack.c.l.b16 %v19
    %v57 = vunpack.c.l.b16 %v20
    %v58 = vunpack.c.l.b16 %v21
    %v59 = vunpack.c.l.b16 %v22
    %v60 = vunpack.c.l.b16 %v23
    %v61 = vunpack.c.l.b16 %v24
    %v62 = vunpack.c.l.b16 %v25
    %v63 = vunpack.c.l.b16 %v26
    %v64 = vunpack.c.l.b16 %v27
    %v65 = vunpack.c.l.b16 %v28
    %v66 = vunpack.c.l.b16 %v29
    %v67 = vunpack.c.l.b16 %v30
    %v68 = vunpack.c.l.b16 %v31
    %v69 = vpack.c.b16 %v54, %v53
    %v70 = vpack.c.b16 %v56, %v55
    %v71 = vpack.c.b16 %v58, %v57
    %v72 = vpack.c.b16 %v60, %v59
    %v73 = vpack.c.b16 %v62, %v61
    %v74 = vpack.c.b16 %v64, %v63
    %v75 = vpack.c.b16 %v66, %v65
    %v76 = vpack.c.b16 %v68, %v67
    %vm77 = vcmask 31744
    %v79 = vsel %vm77, %v69, 0
    %v82 = vsel %vm77, %v70, 0
    %v85 = vsel %vm77, %v71, 0
    %v88 = vsel %vm77, %v72, 0
    %v91 = vsel %vm77, %v73, 0
    %v94 = vsel %vm77, %v74, 0
    %v97 = vsel %vm77, %v75, 0
    %v100 = vsel %vm77, %v76, 0
    %vm102 = vcmask 1041408
    %v104 = vsel %vm102, %v32, 0
    %106 = vmatpush.bf16.msra.mxu0 0
    %107 = vmatpush.bf16.msra.mxu0 0
    %108 = vmatpush.bf16.msra.mxu0 0
    %109 = vmatpush.bf16.msra.mxu0 0
    %110 = vmatpush.bf16.msra.mxu0 0
    %111 = vmatpush.bf16.msra.mxu0 0
    %112 = vmatpush.bf16.msra.mxu0 0
    %113 = vmatpush.bf16.msra.mxu0 %v104
    %114 = vmatmul.bf16.gmra.mxu0 %v79
    %v115 = vpop.f32.mrf.mxu0
    %v116 = vadd.f32 %v35, %v115
    %v117 = vpop.f32.mrf.mxu0
    %v118 = vadd.f32 %v35, %v117
    %119 = vmatmul.bf16.gmra.mxu0 %v82
    %v120 = vpop.f32.mrf.mxu0
    %v121 = vadd.f32 %v35, %v120
    %v122 = vpop.f32.mrf.mxu0
    %v123 = vadd.f32 %v35, %v122
    %124 = vmatmul.bf16.gmra.mxu0 %v85
    %v125 = vpop.f32.mrf.mxu0
    %v126 = vadd.f32 %v35, %v125
    %v127 = vpop.f32.mrf.mxu0
    %v128 = vadd.f32 %v35, %v127
    %129 = vmatmul.bf16.gmra.mxu0 %v88
    %v130 = vpop.f32.mrf.mxu0
    %v131 = vadd.f32 %v35, %v130
    %v132 = vpop.f32.mrf.mxu0
    %v133 = vadd.f32 %v35, %v132
    %134 = vmatmul.bf16.gmra.mxu0 %v91
    %v135 = vpop.f32.mrf.mxu0
    %v136 = vadd.f32 %v35, %v135
    %v137 = vpop.f32.mrf.mxu0
    %v138 = vadd.f32 %v35, %v137
    %139 = vmatmul.bf16.gmra.mxu0 %v94
    %v140 = vpop.f32.mrf.mxu0
    %v141 = vadd.f32 %v35, %v140
    %v142 = vpop.f32.mrf.mxu0
    %v143 = vadd.f32 %v35, %v142
    %144 = vmatmul.bf16.gmra.mxu0 %v97
    %v145 = vpop.f32.mrf.mxu0
    %v146 = vadd.f32 %v35, %v145
    %v147 = vpop.f32.mrf.mxu0
    %v148 = vadd.f32 %v35, %v147
    %149 = vmatmul.bf16.gmra.mxu0 %v100
    %v150 = vpop.f32.mrf.mxu0
    %v151 = vadd.f32 %v35, %v150
    %v152 = vpop.f32.mrf.mxu0
    %v153 = vadd.f32 %v35, %v152
    %154 = vdwg.mxu0
    %v155 = vpack.c.bf16 %v116, %v116
    %v156 = vpack.c.bf16 %v118, %v118
    %v157 = vpack.c.bf16 %v121, %v121
    %v158 = vpack.c.bf16 %v123, %v123
    %v159 = vpack.c.bf16 %v126, %v126
    %v160 = vpack.c.bf16 %v128, %v128
    %v161 = vpack.c.bf16 %v131, %v131
    %v162 = vpack.c.bf16 %v133, %v133
    %v163 = vpack.c.bf16 %v136, %v136
    %v164 = vpack.c.bf16 %v138, %v138
    %v165 = vpack.c.bf16 %v141, %v141
    %v166 = vpack.c.bf16 %v143, %v143
    %v167 = vpack.c.bf16 %v146, %v146
    %v168 = vpack.c.bf16 %v148, %v148
    %v169 = vpack.c.bf16 %v151, %v151
    %v170 = vpack.c.bf16 %v153, %v153
    %171 = vst [vmem:[#allocation2] sm:$0xf] %v155
    %172 = vst [vmem:[#allocation2 + $0x4] sm:$0xf] %v156
    %173 = vst [vmem:[#allocation2 + $0x8] sm:$0xf] %v157
    %174 = vst [vmem:[#allocation2 + $0xc] sm:$0xf] %v158
    %175 = vst [vmem:[#allocation2 + $0x10] sm:$0xf] %v159
    %176 = vst [vmem:[#allocation2 + $0x14] sm:$0xf] %v160
    %177 = vst [vmem:[#allocation2 + $0x18] sm:$0xf] %v161
    %178 = vst [vmem:[#allocation2 + $0x1c] sm:$0xf] %v162
    %179 = vst [vmem:[#allocation2 + $0x20] sm:$0xf] %v163
    %180 = vst [vmem:[#allocation2 + $0x24] sm:$0xf] %v164
    %181 = vst [vmem:[#allocation2 + $0x28] sm:$0xf] %v165
    %182 = vst [vmem:[#allocation2 + $0x2c] sm:$0xf] %v166
    %183 = vst [vmem:[#allocation2 + $0x30] sm:$0xf] %v167
    %184 = vst [vmem:[#allocation2 + $0x34] sm:$0xf] %v168
    %185 = vst [vmem:[#allocation2 + $0x38] sm:$0xf] %v169
    %186 = vst [vmem:[#allocation2 + $0x3c] sm:$0xf] %v170
    // Predicated region
    $region14: #{tpu_custom_call.1} parent=1 // pred_check
      _
    $region15: #{tpu_custom_call.1} parent=1 // pred_check_branch
      %188 = sbr.rel (0) target = $region17
    $region16: #{tpu_custom_call.1} parent=1 // pred_region
      %190 = vsyncadd [#allocation3], 0
      %s191 = sshll.u32 [#allocation2], 4
      %s192 = int_to_ptr.vmem [resolvable:$true] %s191
      %s193 = sshll.u32 %s3, 4
      %s194 = int_to_ptr.hbm [resolvable:$true] %s193
      %199 = dma.vmem_to_hbm [thread:$0]  %s192, 1024, %s194, [#allocation3], 64, 64, 4
    $region17: #{tpu_custom_call.1} parent=1 // pred_fallthru
      _
    // Predicated region
    $region18: #{tpu_custom_call.1} parent=1 // pred_check
      _
    $region19: #{tpu_custom_call.1} parent=1 // pred_check_branch
      %201 = sbr.rel (0) target = $region21
    $region20: #{tpu_custom_call.1} parent=1 // pred_region
      %203 = dma.done [#allocation3], 1024
    $region21: #{tpu_custom_call.1} parent=1 // pred_fallthru
      _
    %204 = vsyncpa [#allocation3], 1

</llo_original>
